<compile_context>
chip_gen: v7x
topology: tpu7x:2x2x1
jax: 0.10.0
libtpu: 0.0.40
codegen_flags: <defaults>
</compile_context>

<pallas_src>
import math

import jax
import jax.numpy as jnp
from jax.experimental import pallas as pl
from jax.experimental.pallas import tpu as pltpu


_LANE = 128
_SUBLANE = 8
_DENSE_WEIGHT_BYTES = 2 * 1024 * 1024  # materialize kron(A,B) below this size


def _round_up(x, m):
    return ((x + m - 1) // m) * m


def _pick_tm(M, tm):
    """Effective M tile (multiple of 8) and padded M."""
    tm_eff = min(tm, _round_up(M, _SUBLANE))
    return tm_eff, _round_up(M, tm_eff)


def _compiler_params(est_vmem_bytes):
    kwargs = dict(dimension_semantics=("parallel",))
    # Default scoped VMEM (~32 MiB) is fine for small tiles; only raise when the
    # tile budget needs it, and stay below v7x's 64 MiB physical VMEM.
    if est_vmem_bytes > 24 * 1024 * 1024:
        kwargs["vmem_limit_bytes"] = int(min(est_vmem_bytes + 8 * 1024 * 1024,
                                             60 * 1024 * 1024))
    return pltpu.CompilerParams(**kwargs)


# --------------------------------------------------------------------------- #
# Dense path: small kron(A, B) -> one lane-dense MXU matmul per M tile.
# --------------------------------------------------------------------------- #
def _dense_kernel(x_ref, wT_ref, bias_ref, out_ref):
    acc = jnp.dot(x_ref[...], wT_ref[...], preferred_element_type=jnp.float32)
    acc = acc + bias_ref[...]
    out_ref[...] = acc.astype(out_ref.dtype)


def _dense_forward(x, A, B, bias, tm):
    M, K = x.shape
    N = A.shape[0] * B.shape[0]
    wT = jnp.kron(A, B).T.astype(x.dtype)                    # (K, N), small
    Np = _round_up(N, _LANE)                                  # lane-dense stores
    if Np != N:
        wT = jnp.pad(wT, ((0, 0), (0, Np - N)))
    if bias is None:
        bias_f32 = jnp.zeros((1, Np), jnp.float32)
    else:
        bias_f32 = jnp.pad(bias.astype(jnp.float32).reshape(1, N),
                           ((0, 0), (0, Np - N)))
    tm_eff, M_pad = _pick_tm(M, tm)
    x_p = x if M_pad == M else jnp.pad(x, ((0, M_pad - M), (0, 0)))

    est = 4 * (2 * tm_eff * K + 2 * tm_eff * Np + 2 * K * Np + 2 * Np)
    out = pl.pallas_call(
        _dense_kernel,
        out_shape=jax.ShapeDtypeStruct((M_pad, Np), x.dtype),
        grid=(M_pad // tm_eff,),
        in_specs=[
            pl.BlockSpec((tm_eff, K), lambda i: (i, 0)),      # X tile
            pl.BlockSpec((K, Np), lambda i: (0, 0)),          # kron(A,B)^T (full)
            pl.BlockSpec((1, Np), lambda i: (0, 0)),          # bias (full)
        ],
        out_specs=pl.BlockSpec((tm_eff, Np), lambda i: (i, 0)),
        compiler_params=_compiler_params(est),
    )(x_p, wT, bias_f32)
    return out[:M, :N]


# --------------------------------------------------------------------------- #
# Factored path: big factor F1 on the MXU, small factor F2 as SMEM scalars.
#   r[m, f2n*F1_Np + f1n] = sum_{f1k, f2k} xg[m, f2k*F1_K + f1k] F1[f1n,f1k] F2[f2n,f2k]
# --------------------------------------------------------------------------- #
def _factored_kernel(f2_ref, xg_ref, f1T_ref, out_ref):
    F1_K, F1_Np = f1T_ref.shape
    F2_N, F2_K = f2_ref.shape
    f1T = f1T_ref[...]
    # Stage 1 (MXU): one full-depth matmul per small-factor input index.
    ys = []
    for f2k in range(F2_K):
        xk = xg_ref[:, f2k * F1_K:(f2k + 1) * F1_K]           # contiguous lane slice
        ys.append(jnp.dot(xk, f1T, preferred_element_type=jnp.float32))
    # Stage 2 (VPU, tiny: F2_N*F2_K scalar*matrix fmas): combine with small factor.
    for f2n in range(F2_N):
        acc = ys[0] * f2_ref[f2n, 0]
        for f2k in range(1, F2_K):
            acc = acc + ys[f2k] * f2_ref[f2n, f2k]
        out_ref[:, f2n * F1_Np:(f2n + 1) * F1_Np] = acc.astype(out_ref.dtype)


def _factored_call(x_g, F1, F2, tm):
    M, K = x_g.shape
    F1_N, F1_K = F1.shape
    F2_N, F2_K = F2.shape
    assert K == F1_K * F2_K
    F1_Np = _round_up(F1_N, _LANE)                            # lane-dense output groups
    f1T = F1.T.astype(x_g.dtype)
    if F1_Np != F1_N:
        f1T = jnp.pad(f1T, ((0, 0), (0, F1_Np - F1_N)))
    f2 = F2.astype(jnp.float32)                               # scalars -> SMEM
    tm_eff, M_pad = _pick_tm(M, tm)
    x_p = x_g if M_pad == M else jnp.pad(x_g, ((0, M_pad - M), (0, 0)))
    Np = F2_N * F1_Np

    est = 4 * (2 * tm_eff * K + 2 * tm_eff * Np + 2 * F1_K * F1_Np
               + (F2_K + 1) * tm_eff * F1_Np)
    r = pl.pallas_call(
        _factored_kernel,
        out_shape=jax.ShapeDtypeStruct((M_pad, Np), x_g.dtype),
        grid=(M_pad // tm_eff,),
        in_specs=[
            pl.BlockSpec(memory_space=pltpu.MemorySpace.SMEM),  # small factor (scalars)
            pl.BlockSpec((tm_eff, K), lambda i: (i, 0)),        # grouped activations
            pl.BlockSpec((F1_K, F1_Np), lambda i: (0, 0)),      # big factor, transposed
        ],
        out_specs=pl.BlockSpec((tm_eff, Np), lambda i: (i, 0)),
        compiler_params=_compiler_params(est),
    )(f2, x_p, f1T)
    return r[:M], F1_Np


def kron_linear_forward(x, A, B, bias=None, *, tm=256, method="auto"):
    """Y = X @ kron(A, B)^T + bias.  method in {"auto", "dense", "factored"}."""
    M, K = x.shape
    A_N, A_K = A.shape
    B_N, B_K = B.shape
    N = A_N * B_N
    assert K == A_K * B_K, f"K={K} must equal A_K*B_K={A_K * B_K}"

    if method == "auto":
        w_bytes = K * N * jnp.dtype(x.dtype).itemsize
        method = "dense" if w_bytes <= _DENSE_WEIGHT_BYTES else "factored"
    if method == "dense":
        return _dense_forward(x, A, B, bias, tm)

    # Factored path: put the larger factor on the MXU (full contraction depth).
    if A.size >= B.size:
        # Group X's columns as k*A_K + a_k (cheap XLA transpose in the wrapper;
        # this path is compute bound so the extra X pass is negligible).
        x_g = jnp.transpose(x.reshape(M, A_K, B_K), (0, 2, 1)).reshape(M, K)
        r, A_Np = _factored_call(x_g, A, B, tm)     # (M, B_N*A_Np), col = b*A_Np + a
        out = jnp.transpose(
            r.reshape(M, B_N, A_Np)[:, :, :A_N], (0, 2, 1)).reshape(M, N)
    else:
        # kron(A,B) = P_out . kron(B,A) . P_in ; with roles swapped the kernel's
        # natural input/output layouts coincide with X's and Y's original layouts.
        r, B_Np = _factored_call(x, B, A, tm)       # (M, A_N*B_Np), col = a*B_Np + b
        out = r.reshape(M, A_N, B_Np)[:, :, :B_N].reshape(M, N)

    if bias is not None:
        out = out + bias.astype(out.dtype)
    return out


class KroneckerLinear:
    """JAX/Pallas port of TritonKroneckerLinear (forward only)."""

    def __init__(self, in_features, out_features, in_factors, out_factors,
                 bias=True, key=None, dtype=jnp.float32):
        assert in_factors[0] * in_factors[1] == in_features
        assert out_factors[0] * out_factors[1] == out_features
        self.in_features = in_features
        self.out_features = out_features
        self.in_factor1, self.in_factor2 = in_factors
        self.out_factor1, self.out_factor2 = out_factors

        key = jax.random.PRNGKey(0) if key is None else key
        kA, kB, kbias = jax.random.split(key, 3)

        # kaiming_uniform_(a=sqrt(5)) -> uniform(-1/sqrt(fan_in), 1/sqrt(fan_in))
        bound_A = 1.0 / math.sqrt(self.in_factor1)
        bound_B = 1.0 / math.sqrt(self.in_factor2)
        self.kn_factor_A = jax.random.uniform(
            kA, (self.out_factor1, self.in_factor1), dtype,
            minval=-bound_A, maxval=bound_A)
        self.kn_factor_B = jax.random.uniform(
            kB, (self.out_factor2, self.in_factor2), dtype,
            minval=-bound_B, maxval=bound_B)
        if bias:
            bound = 1.0 / math.sqrt(in_features)
            self.bias = jax.random.uniform(
                kbias, (out_features,), dtype, minval=-bound, maxval=bound)
        else:
            self.bias = None
        # TODO(synk): optional bf16 compute path for v6e/v7x (halves HBM traffic,
        # doubles MXU rate) is left out to keep f32 numerics identical to the spec.

    def __call__(self, x, method="auto"):
        return kron_linear_forward(x, self.kn_factor_A, self.kn_factor_B,
                                   self.bias, method=method)


def _reference_forward(x, A, B, bias):
    """Pure-JAX reference: Y = X @ kron(A, B)^T + bias (materializes full weight)."""
    W = jnp.kron(A, B)
    out = jnp.dot(x, W.T, precision=jax.lax.Precision.HIGHEST)
    if bias is not None:
        out = out + bias
    return out


if __name__ == "__main__":
    key = jax.random.PRNGKey(0)

    def check(M, in_features, out_features, in_factors, out_factors,
              method, use_bias, k):
        kx, kp = jax.random.split(k)
        x = jax.random.normal(kx, (M, in_features), jnp.float32)
        layer = KroneckerLinear(in_features, out_features, in_factors,
                                out_factors, bias=use_bias, key=kp)
        out = jax.block_until_ready(
            kron_linear_forward(x, layer.kn_factor_A, layer.kn_factor_B,
                                layer.bias, method=method))
        ref = _reference_forward(x, layer.kn_factor_A, layer.kn_factor_B,
                                 layer.bias)
        assert out.shape == (M, out_features)
        err = float(jnp.max(jnp.abs(out - ref)))
        assert jnp.allclose(out, ref, atol=5e-3, rtol=5e-3), (method, err)

    keys = jax.random.split(key, 4)
    # 1) module's demo-scale config -> dense path, multi-step M grid (padded batch)
    check(300, 32, 32, (8, 4), (8, 4), "auto", True, keys[0])
    # 2) factored path, A is the big factor, ragged batch exercises M padding
    check(600, 256, 256, (64, 4), (64, 4), "factored", True, keys[1])
    # 3) factored path with roles swapped (B is the big factor), no bias
    check(64, 256, 256, (4, 64), (4, 64), "factored", False, keys[2])
    # 4) layer __call__ end to end
    layer = KroneckerLinear(32, 32, (8, 4), (8, 4), bias=True, key=keys[3])
    x = jax.random.normal(keys[3], (16, 32), jnp.float32)
    y = jax.block_until_ready(layer(x))
    assert y.shape == (16, 32)

    print("KERNEL_OK")
</pallas_src>

<mosaic_0001>
module attributes {stable_mosaic.version = 11 : i64} {
  func.func @_dense_kernel(%arg0: i32, %arg1: memref<256x32xf32, #tpu.memory_space<vmem>>, %arg2: memref<32x128xf32, #tpu.memory_space<vmem>>, %arg3: memref<1x128xf32, #tpu.memory_space<vmem>>, %arg4: memref<256x128xf32, #tpu.memory_space<vmem>>) attributes {dimension_semantics = [#tpu.dimension_semantics<parallel>], iteration_bounds = array<i64: 2>, scalar_prefetch = 0 : i64, scratch_operands = 0 : i64, tpu.core_type = #tpu.core_type<tc>, window_params = [{transform_indices = @transform_0, window_bounds = array<i64: 256, 32>}, {pipeline_mode = #tpu.pipeline_mode<synchronous>, transform_indices = @transform_1, window_bounds = array<i64: 32, 128>}, {pipeline_mode = #tpu.pipeline_mode<synchronous>, transform_indices = @transform_2, window_bounds = array<i64: 1, 128>}, {transform_indices = @transform_3, window_bounds = array<i64: 256, 128>}]} {
    %c0 = arith.constant 0 : index
    %c0_0 = arith.constant 0 : index
    %0 = vector.load %arg1[%c0, %c0_0] : memref<256x32xf32, #tpu.memory_space<vmem>>, vector<256x32xf32>
    %c0_1 = arith.constant 0 : index
    %c0_2 = arith.constant 0 : index
    %1 = vector.load %arg2[%c0_1, %c0_2] : memref<32x128xf32, #tpu.memory_space<vmem>>, vector<32x128xf32>
    %cst = arith.constant dense<0.000000e+00> : vector<256x128xf32>
    %2 = tpu.matmul %0, %1, %cst {dimension_numbers = #tpu.dot_dimension_numbers<[1], [0], [0], [1], [0, 0, 1, 1], [], []>} : vector<256x32xf32>, vector<32x128xf32>, vector<256x128xf32> -> vector<256x128xf32>
    %c0_3 = arith.constant 0 : index
    %c0_4 = arith.constant 0 : index
    %3 = vector.load %arg3[%c0_3, %c0_4] : memref<1x128xf32, #tpu.memory_space<vmem>>, vector<1x128xf32>
    %4 = vector.broadcast %3 : vector<1x128xf32> to vector<256x128xf32>
    %5 = arith.addf %2, %4 : vector<256x128xf32>
    %c0_5 = arith.constant 0 : index
    %c0_6 = arith.constant 0 : index
    %6 = vector.load %arg4[%c0_5, %c0_6] : memref<256x128xf32, #tpu.memory_space<vmem>>, vector<256x128xf32>
    tpu.vector_store %arg4[%c0_5, %c0_6], %5 {strides = array<i32>} : memref<256x128xf32, #tpu.memory_space<vmem>>, vector<256x128xf32>,
    return
  }
  func.func @transform_0(%arg0: i32) -> (i32, i32) {
    %c0_i32 = arith.constant 0 : i32
    %c0_i32_0 = arith.constant 0 : i32
    return %arg0, %c0_i32 : i32, i32
  }
  func.func @transform_1(%arg0: i32) -> (i32, i32) {
    %c0_i32 = arith.constant 0 : i32
    %c0_i32_0 = arith.constant 0 : i32
    %c0_i32_1 = arith.constant 0 : i32
    return %c0_i32, %c0_i32_0 : i32, i32
  }
  func.func @transform_2(%arg0: i32) -> (i32, i32) {
    %c0_i32 = arith.constant 0 : i32
    %c0_i32_0 = arith.constant 0 : i32
    %c0_i32_1 = arith.constant 0 : i32
    return %c0_i32, %c0_i32_0 : i32, i32
  }
  func.func @transform_3(%arg0: i32) -> (i32, i32) {
    %c0_i32 = arith.constant 0 : i32
    %c0_i32_0 = arith.constant 0 : i32
    return %arg0, %c0_i32 : i32, i32
  }
}

</mosaic_0001>

<llo_original>
// kernel: tpu_custom_call.1
$region0: #{tpu_custom_call.1}
  #allocation0 [shape = 'u32[]', space=smem, size = 0x4, offset = 0x4, fixed_abs, tag = 'smem constant byte address 0x4 - core index']
  #allocation1 [shape = 'u32[144,128]{1,0:T(1,128)}', space=vmem, size = 0x12000, scoped, tag = 'internal scratch']
  %s0 = inlined_call_operand.vmem [shape: f32[512,32], index: 0, kind: input, shape index: {}]
  %s1 = inlined_call_operand.vmem [shape: f32[32,128], index: 1, kind: input, shape index: {}]
  %s2 = inlined_call_operand.vmem [shape: f32[1,128], index: 2, kind: input, shape index: {}]
  %s3 = inlined_call_operand.hbm [shape: f32[512,128], index: 3, kind: output, shape index: {}]
  %s4 = sld [smem:[#allocation0]]
  $region45: #{tpu_custom_call.1} parent=0
    _
  %s6 = ssub.s32 1, %s4
  %s7 = scalar_select 0, %s6, %s4
  $region1: #{tpu_custom_call.1} parent=0
    #allocation2 [shape = 'u8[262144]{0}', space=vmem, size = 0x40000, scoped, tag = 'output window, operand 0']
    #allocation3 [shape = 's32[2]{0}', space=sflag, size = 0x8, scoped, tag = 'scoped memory for tpu_custom_call.1']
    %8 = vsyncpa [#allocation3], 0
    %s9 = scalar_lea.sflag [#allocation3], 1
    %10 = vsyncpa %s9, 0
    loop: start=0, step=1, limit=4
    $region2: #{tpu_custom_call.1} parent=1 // loop_pre_header
      _
    $region3: #{tpu_custom_call.1} parent=1 // loop_header
      %s12 = sphi 0, %s16
      %p13 = scmp.ge.s32.totalorder %s12, 4
      %s22 = sphi 0, %s24
      %s25 = sphi 0, %s22
      %s26 = sphi 0, %s25
      %s42 = sphi 0, %s26
      %s46 = sphi 0, %s46
      %s48 = sphi 0, %s46
      %s49 = sphi 0, %s48
      %s63 = sphi 0, %s49
      %s67 = sphi 0, %s67
      %s69 = sphi 0, %s67
      %s70 = sphi 0, %s69
      %s84 = sphi 0, %s70
      %s90 = sphi 0, %s92
      %s93 = sphi 0, %s90
      %s94 = sphi 0, %s93
      %s110 = sphi 0, %s94
    $region4: #{tpu_custom_call.1} parent=1 // loop_header_branch
      %15 = sbr.rel (%p13) target = $region8
    $region5: #{tpu_custom_call.1} parent=1 // loop_body
      %s17 = ssub.s32 %s12, 1
      %s18 = ssub.s32 %s12, 2
      %s19 = sadd.s32 %s12, 1
      %s20 = ssub.s32 %s12, %s19
      %p21 = scmp.eq.s32.totalorder %s20, 0
      %s23 = sadd.s32 %s22, 1
      %s24 = scalar_select %p21, %s22, %s23
      %p27 = pneg %p21
      %p28 = scmp.eq.s32.totalorder %s12, 1
      %p29 = por %p27, %p28
      %p30 = scmp.ne.s32.totalorder %s22, %s25
      %p31 = scmp.eq.s32.totalorder %s12, 0
      %p32 = por %p30, %p31
      %p33 = scmp.ne.s32.totalorder %s22, %s25
      %p34 = scmp.eq.s32.totalorder %s17, 1
      %p35 = por %p33, %p34
      %p36 = scmp.ne.s32.totalorder %s25, %s26
      %p37 = scmp.eq.s32.totalorder %s17, 0
      %p38 = por %p36, %p37
      %p39 = scmp.ne.s32.totalorder %s25, %s26
      %p40 = scmp.eq.s32.totalorder %s18, 1
      %p41 = por %p39, %p40
      %p43 = scmp.ne.s32.totalorder %s26, %s42
      %p44 = scmp.eq.s32.totalorder %s18, 0
      %p45 = por %p43, %p44
      %s47 = sadd.s32 %s46, 1
      %p50 = scmp.eq.s32.totalorder %s12, 1
      %p51 = scmp.ne.s32.totalorder %s46, %s48
      %p52 = scmp.eq.s32.totalorder %s12, 0
      %p53 = por %p51, %p52
      %p54 = scmp.ne.s32.totalorder %s46, %s48
      %p55 = scmp.eq.s32.totalorder %s17, 1
      %p56 = por %p54, %p55
      %p57 = scmp.ne.s32.totalorder %s48, %s49
      %p58 = scmp.eq.s32.totalorder %s17, 0
      %p59 = por %p57, %p58
      %p60 = scmp.ne.s32.totalorder %s48, %s49
      %p61 = scmp.eq.s32.totalorder %s18, 1
      %p62 = por %p60, %p61
      %p64 = scmp.ne.s32.totalorder %s49, %s63
      %p65 = scmp.eq.s32.totalorder %s18, 0
      %p66 = por %p64, %p65
      %s68 = sadd.s32 %s67, 1
      %p71 = scmp.eq.s32.totalorder %s12, 1
      %p72 = scmp.ne.s32.totalorder %s67, %s69
      %p73 = scmp.eq.s32.totalorder %s12, 0
      %p74 = por %p72, %p73
      %p75 = scmp.ne.s32.totalorder %s67, %s69
      %p76 = scmp.eq.s32.totalorder %s17, 1
      %p77 = por %p75, %p76
      %p78 = scmp.ne.s32.totalorder %s69, %s70
      %p79 = scmp.eq.s32.totalorder %s17, 0
      %p80 = por %p78, %p79
      %p81 = scmp.ne.s32.totalorder %s69, %s70
      %p82 = scmp.eq.s32.totalorder %s18, 1
      %p83 = por %p81, %p82
      %p85 = scmp.ne.s32.totalorder %s70, %s84
      %p86 = scmp.eq.s32.totalorder %s18, 0
      %p87 = por %p85, %p86
      %s88 = ssub.s32 %s12, %s19
      %p89 = scmp.eq.s32.totalorder %s88, 0
      %s91 = sadd.s32 %s90, 1
      %s92 = scalar_select %p89, %s90, %s91
      %p95 = pneg %p89
      %p96 = scmp.eq.s32.totalorder %s12, 1
      %p97 = por %p95, %p96
      %p98 = scmp.ne.s32.totalorder %s90, %s93
      %p99 = scmp.eq.s32.totalorder %s12, 0
      %p100 = por %p98, %p99
      %p101 = scmp.ne.s32.totalorder %s90, %s93
      %p102 = scmp.eq.s32.totalorder %s17, 1
      %p103 = por %p101, %p102
      %p104 = scmp.ne.s32.totalorder %s93, %s94
      %p105 = scmp.eq.s32.totalorder %s17, 0
      %p106 = por %p104, %p105
      %p107 = scmp.ne.s32.totalorder %s93, %s94
      %p108 = scmp.eq.s32.totalorder %s18, 1
      %p109 = por %p107, %p108
      %p111 = scmp.ne.s32.totalorder %s94, %s110
      %p112 = scmp.eq.s32.totalorder %s18, 0
      %p113 = por %p111, %p112
      %p114 = scmp.le.s32.totalorder 1, %s12
      %p115 = scmp.lt.s32.totalorder %s12, 3
      %p116 = pnand %p114, %p115
      %p117 = pneg %p116
      // Predicated region
      $region9: #{tpu_custom_call.1} parent=5 // pred_check
        _
      $region10: #{tpu_custom_call.1} parent=5 // pred_check_branch
        %119 = sbr.rel (%p116) target = $region12
      $region11: #{tpu_custom_call.1} parent=5 // pred_region
        %s120 = ssub.s32 %s12, 1
        // Predicated region
        $region13: #{tpu_custom_call.1} parent=11 // pred_check
          %p121 = pneg %p59
        $region14: #{tpu_custom_call.1} parent=11 // pred_check_branch
          %123 = sbr.rel (%p121) target = $region16
        $region15: #{tpu_custom_call.1} parent=11 // pred_region
          _
        $region16: #{tpu_custom_call.1} parent=11 // pred_fallthru
          _
        // Predicated region
        $region17: #{tpu_custom_call.1} parent=11 // pred_check
          %p124 = pneg %p80
        $region18: #{tpu_custom_call.1} parent=11 // pred_check_branch
          %126 = sbr.rel (%p124) target = $region20
        $region19: #{tpu_custom_call.1} parent=11 // pred_region
          _
        $region20: #{tpu_custom_call.1} parent=11 // pred_fallthru
          _
      $region12: #{tpu_custom_call.1} parent=5 // pred_fallthru
        _
      %p127 = scmp.lt.s32.totalorder %s12, 2
      // Predicated region
      $region21: #{tpu_custom_call.1} parent=5 // pred_check
        %p128 = pneg %p127
      $region22: #{tpu_custom_call.1} parent=5 // pred_check_branch
        %130 = sbr.rel (%p128) target = $region24
      $region23: #{tpu_custom_call.1} parent=5 // pred_region
        // Predicated region
        $region25: #{tpu_custom_call.1} parent=23 // pred_check
          %p131 = pneg %p32
        $region26: #{tpu_custom_call.1} parent=23 // pred_check_branch
          %133 = sbr.rel (%p131) target = $region28
        $region27: #{tpu_custom_call.1} parent=23 // pred_region
          %s134 = smul.u32 32, %s12
          %p135 = scmp.lt.s32.totalorder %s134, 63
          %s136 = scalar_select %p135, %s134, 63
          %s137 = smul.addr %s136, 8
          %s138 = scalar_lea.vmem %s0, %s137
          %s139 = smul.u32 32, %s12
        $region28: #{tpu_custom_call.1} parent=23 // pred_fallthru
          _
      $region24: #{tpu_custom_call.1} parent=5 // pred_fallthru
        _
      %p140 = scmp.le.s32.totalorder 1, %s12
      %p141 = scmp.lt.s32.totalorder %s12, 3
      %p142 = pnand %p140, %p141
      %p143 = pneg %p142
      // Predicated region
      $region29: #{tpu_custom_call.1} parent=5 // pred_check
        _
      $region30: #{tpu_custom_call.1} parent=5 // pred_check_branch
        %145 = sbr.rel (%p142) target = $region32
      $region31: #{tpu_custom_call.1} parent=5 // pred_region
        %s146 = ssub.s32 %s12, 1
        %s147 = smul.u32 32, %s17
        %p148 = scmp.lt.s32.totalorder %s147, 63
        %s149 = scalar_select %p148, %s147, 63
        %s150 = smul.addr %s149, 8
        %s151 = scalar_lea.vmem %s0, %s150
        %p152 = pneg %p38
        %p153 = pneg %p35
        %p154 = pneg %p59
        %p155 = pneg %p56
        %p156 = pneg %p80
        %p157 = pneg %p77
        %p158 = pneg %p106
        %p159 = pneg %p103
        %s160 = sand.u32 %s93, 1
        %s161 = scalar_lea.sflag [#allocation3], %s160
        %s162 = sand.u32 %s93, 1
        %s163 = smul.addr %s162, 256
        %s164 = scalar_lea.vmem [#allocation2], %s163
        %s165 = smul.u32 32, %s17
        %p166 = scmp.lt.s32.totalorder %s165, 63
        %s167 = scalar_select %p166, %s165, 63
        %s168 = smul.addr %s167, 8
        %s169 = scalar_lea.vmem %s0, %s168
        %s170 = smul.u32 32, %s17
        %s171 = smul.u32 32, %s17
        %v172 = vld [vmem:[%s169] sm:$0xff]
        %v173 = vld [vmem:[%s169 + $0x8] sm:$0xff]
        %v174 = vld [vmem:[%s169 + $0x10] sm:$0xff]
        %v175 = vld [vmem:[%s169 + $0x18] sm:$0xff]
        %v176 = vld [vmem:[%s169 + $0x20] sm:$0xff]
        %v177 = vld [vmem:[%s169 + $0x28] sm:$0xff]
        %v178 = vld [vmem:[%s169 + $0x30] sm:$0xff]
        %v179 = vld [vmem:[%s169 + $0x38] sm:$0xff]
        %v180 = vld [vmem:[%s169 + $0x40] sm:$0xff]
        %v181 = vld [vmem:[%s169 + $0x48] sm:$0xff]
        %v182 = vld [vmem:[%s169 + $0x50] sm:$0xff]
        %v183 = vld [vmem:[%s169 + $0x58] sm:$0xff]
        %v184 = vld [vmem:[%s169 + $0x60] sm:$0xff]
        %v185 = vld [vmem:[%s169 + $0x68] sm:$0xff]
        %v186 = vld [vmem:[%s169 + $0x70] sm:$0xff]
        %v187 = vld [vmem:[%s169 + $0x78] sm:$0xff]
        %v188 = vld [vmem:[%s169 + $0x80] sm:$0xff]
        %v189 = vld [vmem:[%s169 + $0x88] sm:$0xff]
        %v190 = vld [vmem:[%s169 + $0x90] sm:$0xff]
        %v191 = vld [vmem:[%s169 + $0x98] sm:$0xff]
        %v192 = vld [vmem:[%s169 + $0xa0] sm:$0xff]
        %v193 = vld [vmem:[%s169 + $0xa8] sm:$0xff]
        %v194 = vld [vmem:[%s169 + $0xb0] sm:$0xff]
        %v195 = vld [vmem:[%s169 + $0xb8] sm:$0xff]
        %v196 = vld [vmem:[%s169 + $0xc0] sm:$0xff]
        %v197 = vld [vmem:[%s169 + $0xc8] sm:$0xff]
        %v198 = vld [vmem:[%s169 + $0xd0] sm:$0xff]
        %v199 = vld [vmem:[%s169 + $0xd8] sm:$0xff]
        %v200 = vld [vmem:[%s169 + $0xe0] sm:$0xff]
        %v201 = vld [vmem:[%s169 + $0xe8] sm:$0xff]
        %v202 = vld [vmem:[%s169 + $0xf0] sm:$0xff]
        %v203 = vld [vmem:[%s169 + $0xf8] sm:$0xff]
        %v204 = vld [vmem:[%s1] sm:$0xff]
        %v205 = vld [vmem:[%s1 + $0x8] sm:$0xff]
        %v206 = vld [vmem:[%s1 + $0x10] sm:$0xff]
        %v207 = vld [vmem:[%s1 + $0x18] sm:$0xff]
        %v208 = vld [vmem:[%s2] sm:$0x1]
        %v210 = vlaneseq
        %v211 = vshrl.u32 %v210, 7
        %v212 = vsub.s32 0, %v211
        %v213 = vrot.slane %v208, %v212
        %vm215 = vcmask 261120
        %v217 = vsel %vm215, %v172, 0
        %v220 = vsel %vm215, %v173, 0
        %v223 = vsel %vm215, %v174, 0
        %v226 = vsel %vm215, %v175, 0
        %v229 = vsel %vm215, %v176, 0
        %v232 = vsel %vm215, %v177, 0
        %v235 = vsel %vm215, %v178, 0
        %v238 = vsel %vm215, %v179, 0
        %v241 = vsel %vm215, %v180, 0
        %v244 = vsel %vm215, %v181, 0
        %v247 = vsel %vm215, %v182, 0
        %v250 = vsel %vm215, %v183, 0
        %v253 = vsel %vm215, %v184, 0
        %v256 = vsel %vm215, %v185, 0
        %v259 = vsel %vm215, %v186, 0
        %v262 = vsel %vm215, %v187, 0
        %v265 = vsel %vm215, %v188, 0
        %v268 = vsel %vm215, %v189, 0
        %v271 = vsel %vm215, %v190, 0
        %v274 = vsel %vm215, %v191, 0
        %v277 = vsel %vm215, %v192, 0
        %v280 = vsel %vm215, %v193, 0
        %v283 = vsel %vm215, %v194, 0
        %v286 = vsel %vm215, %v195, 0
        %v289 = vsel %vm215, %v196, 0
        %v292 = vsel %vm215, %v197, 0
        %v295 = vsel %vm215, %v198, 0
        %v298 = vsel %vm215, %v199, 0
        %v301 = vsel %vm215, %v200, 0
        %v304 = vsel %vm215, %v201, 0
        %v307 = vsel %vm215, %v202, 0
        %v310 = vsel %vm215, %v203, 0
        %312 = vmatprep.subr.mxu0 0.0
        %313 = vmatpush1.msra.mxu0 %v204
        %314 = vmatprep.subr.mxu0 0.0
        %315 = vmatpush1.msra.mxu0 %v205
        %316 = vmatprep.subr.mxu0 0.0
        %317 = vmatpush1.msra.mxu0 %v206
        %318 = vmatprep.subr.mxu0 0.0
        %319 = vmatpush1.msra.mxu0 %v207
        %320 = vmatprep.subr.mxu0 0.0
        %321 = vmatpush1.msra.mxu0 0.0
        %322 = vmatprep.subr.mxu0 0.0
        %323 = vmatpush1.msra.mxu0 0.0
        %324 = vmatprep.subr.mxu0 0.0
        %325 = vmatpush1.msra.mxu0 0.0
        %326 = vmatprep.subr.mxu0 0.0
        %327 = vmatpush1.msra.mxu0 0.0
        %328 = vmatprep.subr.mxu0 0.0
        %329 = vmatpush1.msra.mxu0 0.0
        %330 = vmatprep.subr.mxu0 0.0
        %331 = vmatpush1.msra.mxu0 0.0
        %332 = vmatprep.subr.mxu0 0.0
        %333 = vmatpush1.msra.mxu0 0.0
        %334 = vmatprep.subr.mxu0 0.0
        %335 = vmatpush1.msra.mxu0 0.0
        %336 = vmatprep.subr.mxu0 0.0
        %337 = vmatpush1.msra.mxu0 0.0
        %338 = vmatprep.subr.mxu0 0.0
        %339 = vmatpush1.msra.mxu0 0.0
        %340 = vmatprep.subr.mxu0 0.0
        %341 = vmatpush1.msra.mxu0 0.0
        %342 = vmatprep.subr.mxu0 0.0
        %343 = vmatpush1.msra.mxu0 0.0
        %344 = vmatprep.subr.mxu0 0.0
        %345 = vmatpush1.msra.mxu0 0.0
        %346 = vmatprep.subr.mxu0 0.0
        %347 = vmatpush1.msra.mxu0 0.0
        %348 = vmatprep.subr.mxu0 0.0
        %349 = vmatpush1.msra.mxu0 0.0
        %350 = vmatprep.subr.mxu0 0.0
        %351 = vmatpush1.msra.mxu0 0.0
        %352 = vmatprep.subr.mxu0 0.0
        %353 = vmatpush1.msra.mxu0 0.0
        %354 = vmatprep.subr.mxu0 0.0
        %355 = vmatpush1.msra.mxu0 0.0
        %356 = vmatprep.subr.mxu0 0.0
        %357 = vmatpush1.msra.mxu0 0.0
        %358 = vmatprep.subr.mxu0 0.0
        %359 = vmatpush1.msra.mxu0 0.0
        %360 = vmatprep.subr.mxu0 0.0
        %361 = vmatpush1.msra.mxu0 0.0
        %362 = vmatprep.subr.mxu0 0.0
        %363 = vmatpush1.msra.mxu0 0.0
        %364 = vmatprep.subr.mxu0 0.0
        %365 = vmatpush1.msra.mxu0 0.0
        %366 = vmatprep.subr.mxu0 0.0
        %367 = vmatpush1.msra.mxu0 0.0
        %368 = vmatprep.subr.mxu0 0.0
        %369 = vmatpush1.msra.mxu0 0.0
        %370 = vmatprep.subr.mxu0 0.0
        %371 = vmatpush1.msra.mxu0 0.0
        %372 = vmatprep.subr.mxu0 0.0
        %373 = vmatpush1.msra.mxu0 0.0
        %374 = vmatprep.subr.mxu0 0.0
        %375 = vmatpush1.msra.mxu0 0.0
        %376 = vmatprep.mubr.f32.mxu0 0.0
        %377 = vmatmul.mubr.f32.gmra.mrb[0].mxu0 %v217
        %v378 = vpop.f32.mrb[0].mxu0
        %v379 = vadd.f32 %v213, %v378
        %v380 = vpop.f32.mrb[0].mxu0
        %381 = vmatprep.mubr.f32.mxu0 0.0
        %382 = vmatmul.mubr.f32.gmra.mrb[0].mxu0 %v220
        %v383 = vpop.f32.mrb[0].mxu0
        %v384 = vadd.f32 %v213, %v383
        %v385 = vpop.f32.mrb[0].mxu0
        %386 = vmatprep.mubr.f32.mxu0 0.0
        %387 = vmatmul.mubr.f32.gmra.mrb[0].mxu0 %v223
        %v388 = vpop.f32.mrb[0].mxu0
        %v389 = vadd.f32 %v213, %v388
        %v390 = vpop.f32.mrb[0].mxu0
        %391 = vmatprep.mubr.f32.mxu0 0.0
        %392 = vmatmul.mubr.f32.gmra.mrb[0].mxu0 %v226
        %v393 = vpop.f32.mrb[0].mxu0
        %v394 = vadd.f32 %v213, %v393
        %v395 = vpop.f32.mrb[0].mxu0
        %396 = vmatprep.mubr.f32.mxu0 0.0
        %397 = vmatmul.mubr.f32.gmra.mrb[0].mxu0 %v229
        %v398 = vpop.f32.mrb[0].mxu0
        %v399 = vadd.f32 %v213, %v398
        %v400 = vpop.f32.mrb[0].mxu0
        %401 = vmatprep.mubr.f32.mxu0 0.0
        %402 = vmatmul.mubr.f32.gmra.mrb[0].mxu0 %v232
        %v403 = vpop.f32.mrb[0].mxu0
        %v404 = vadd.f32 %v213, %v403
        %v405 = vpop.f32.mrb[0].mxu0
        %406 = vmatprep.mubr.f32.mxu0 0.0
        %407 = vmatmul.mubr.f32.gmra.mrb[0].mxu0 %v235
        %v408 = vpop.f32.mrb[0].mxu0
        %v409 = vadd.f32 %v213, %v408
        %v410 = vpop.f32.mrb[0].mxu0
        %411 = vmatprep.mubr.f32.mxu0 0.0
        %412 = vmatmul.mubr.f32.gmra.mrb[0].mxu0 %v238
        %v413 = vpop.f32.mrb[0].mxu0
        %v414 = vadd.f32 %v213, %v413
        %v415 = vpop.f32.mrb[0].mxu0
        %416 = vmatprep.mubr.f32.mxu0 0.0
        %417 = vmatmul.mubr.f32.gmra.mrb[0].mxu0 %v241
        %v418 = vpop.f32.mrb[0].mxu0
        %v419 = vadd.f32 %v213, %v418
        %v420 = vpop.f32.mrb[0].mxu0
        %421 = vmatprep.mubr.f32.mxu0 0.0
        %422 = vmatmul.mubr.f32.gmra.mrb[0].mxu0 %v244
        %v423 = vpop.f32.mrb[0].mxu0
        %v424 = vadd.f32 %v213, %v423
        %v425 = vpop.f32.mrb[0].mxu0
        %426 = vmatprep.mubr.f32.mxu0 0.0
        %427 = vmatmul.mubr.f32.gmra.mrb[0].mxu0 %v247
        %v428 = vpop.f32.mrb[0].mxu0
        %v429 = vadd.f32 %v213, %v428
        %v430 = vpop.f32.mrb[0].mxu0
        %431 = vmatprep.mubr.f32.mxu0 0.0
        %432 = vmatmul.mubr.f32.gmra.mrb[0].mxu0 %v250
        %v433 = vpop.f32.mrb[0].mxu0
        %v434 = vadd.f32 %v213, %v433
        %v435 = vpop.f32.mrb[0].mxu0
        %436 = vmatprep.mubr.f32.mxu0 0.0
        %437 = vmatmul.mubr.f32.gmra.mrb[0].mxu0 %v253
        %v438 = vpop.f32.mrb[0].mxu0
        %v439 = vadd.f32 %v213, %v438
        %v440 = vpop.f32.mrb[0].mxu0
        %441 = vmatprep.mubr.f32.mxu0 0.0
        %442 = vmatmul.mubr.f32.gmra.mrb[0].mxu0 %v256
        %v443 = vpop.f32.mrb[0].mxu0
        %v444 = vadd.f32 %v213, %v443
        %v445 = vpop.f32.mrb[0].mxu0
        %446 = vmatprep.mubr.f32.mxu0 0.0
        %447 = vmatmul.mubr.f32.gmra.mrb[0].mxu0 %v259
        %v448 = vpop.f32.mrb[0].mxu0
        %v449 = vadd.f32 %v213, %v448
        %v450 = vpop.f32.mrb[0].mxu0
        %451 = vmatprep.mubr.f32.mxu0 0.0
        %452 = vmatmul.mubr.f32.gmra.mrb[0].mxu0 %v262
        %v453 = vpop.f32.mrb[0].mxu0
        %v454 = vadd.f32 %v213, %v453
        %v455 = vpop.f32.mrb[0].mxu0
        %456 = vmatprep.mubr.f32.mxu0 0.0
        %457 = vmatmul.mubr.f32.gmra.mrb[0].mxu0 %v265
        %v458 = vpop.f32.mrb[0].mxu0
        %v459 = vadd.f32 %v213, %v458
        %v460 = vpop.f32.mrb[0].mxu0
        %461 = vmatprep.mubr.f32.mxu0 0.0
        %462 = vmatmul.mubr.f32.gmra.mrb[0].mxu0 %v268
        %v463 = vpop.f32.mrb[0].mxu0
        %v464 = vadd.f32 %v213, %v463
        %v465 = vpop.f32.mrb[0].mxu0
        %466 = vmatprep.mubr.f32.mxu0 0.0
        %467 = vmatmul.mubr.f32.gmra.mrb[0].mxu0 %v271
        %v468 = vpop.f32.mrb[0].mxu0
        %v469 = vadd.f32 %v213, %v468
        %v470 = vpop.f32.mrb[0].mxu0
        %471 = vmatprep.mubr.f32.mxu0 0.0
        %472 = vmatmul.mubr.f32.gmra.mrb[0].mxu0 %v274
        %v473 = vpop.f32.mrb[0].mxu0
        %v474 = vadd.f32 %v213, %v473
        %v475 = vpop.f32.mrb[0].mxu0
        %476 = vmatprep.mubr.f32.mxu0 0.0
        %477 = vmatmul.mubr.f32.gmra.mrb[0].mxu0 %v277
        %v478 = vpop.f32.mrb[0].mxu0
        %v479 = vadd.f32 %v213, %v478
        %v480 = vpop.f32.mrb[0].mxu0
        %481 = vmatprep.mubr.f32.mxu0 0.0
        %482 = vmatmul.mubr.f32.gmra.mrb[0].mxu0 %v280
        %v483 = vpop.f32.mrb[0].mxu0
        %v484 = vadd.f32 %v213, %v483
        %v485 = vpop.f32.mrb[0].mxu0
        %486 = vmatprep.mubr.f32.mxu0 0.0
        %487 = vmatmul.mubr.f32.gmra.mrb[0].mxu0 %v283
        %v488 = vpop.f32.mrb[0].mxu0
        %v489 = vadd.f32 %v213, %v488
        %v490 = vpop.f32.mrb[0].mxu0
        %491 = vmatprep.mubr.f32.mxu0 0.0
        %492 = vmatmul.mubr.f32.gmra.mrb[0].mxu0 %v286
        %v493 = vpop.f32.mrb[0].mxu0
        %v494 = vadd.f32 %v213, %v493
        %v495 = vpop.f32.mrb[0].mxu0
        %496 = vmatprep.mubr.f32.mxu0 0.0
        %497 = vmatmul.mubr.f32.gmra.mrb[0].mxu0 %v289
        %v498 = vpop.f32.mrb[0].mxu0
        %v499 = vadd.f32 %v213, %v498
        %v500 = vpop.f32.mrb[0].mxu0
        %501 = vmatprep.mubr.f32.mxu0 0.0
        %502 = vmatmul.mubr.f32.gmra.mrb[0].mxu0 %v292
        %v503 = vpop.f32.mrb[0].mxu0
        %v504 = vadd.f32 %v213, %v503
        %v505 = vpop.f32.mrb[0].mxu0
        %506 = vmatprep.mubr.f32.mxu0 0.0
        %507 = vmatmul.mubr.f32.gmra.mrb[0].mxu0 %v295
        %v508 = vpop.f32.mrb[0].mxu0
        %v509 = vadd.f32 %v213, %v508
        %v510 = vpop.f32.mrb[0].mxu0
        %511 = vmatprep.mubr.f32.mxu0 0.0
        %512 = vmatmul.mubr.f32.gmra.mrb[0].mxu0 %v298
        %v513 = vpop.f32.mrb[0].mxu0
        %v514 = vadd.f32 %v213, %v513
        %v515 = vpop.f32.mrb[0].mxu0
        %516 = vmatprep.mubr.f32.mxu0 0.0
        %517 = vmatmul.mubr.f32.gmra.mrb[0].mxu0 %v301
        %v518 = vpop.f32.mrb[0].mxu0
        %v519 = vadd.f32 %v213, %v518
        %v520 = vpop.f32.mrb[0].mxu0
        %521 = vmatprep.mubr.f32.mxu0 0.0
        %522 = vmatmul.mubr.f32.gmra.mrb[0].mxu0 %v304
        %v523 = vpop.f32.mrb[0].mxu0
        %v524 = vadd.f32 %v213, %v523
        %v525 = vpop.f32.mrb[0].mxu0
        %526 = vmatprep.mubr.f32.mxu0 0.0
        %527 = vmatmul.mubr.f32.gmra.mrb[0].mxu0 %v307
        %v528 = vpop.f32.mrb[0].mxu0
        %v529 = vadd.f32 %v213, %v528
        %v530 = vpop.f32.mrb[0].mxu0
        %531 = vmatprep.mubr.f32.mxu0 0.0
        %532 = vmatmul.mubr.f32.gmra.mrb[0].mxu0 %v310
        %v533 = vpop.f32.mrb[0].mxu0
        %v534 = vadd.f32 %v213, %v533
        %v535 = vpop.f32.mrb[0].mxu0
        %536 = vdwg.mxu0
        %537 = vst [vmem:[%s164] sm:$0xff] %v379
        %538 = vst [vmem:[%s164 + $0x8] sm:$0xff] %v384
        %539 = vst [vmem:[%s164 + $0x10] sm:$0xff] %v389
        %540 = vst [vmem:[%s164 + $0x18] sm:$0xff] %v394
        %541 = vst [vmem:[%s164 + $0x20] sm:$0xff] %v399
        %542 = vst [vmem:[%s164 + $0x28] sm:$0xff] %v404
        %543 = vst [vmem:[%s164 + $0x30] sm:$0xff] %v409
        %544 = vst [vmem:[%s164 + $0x38] sm:$0xff] %v414
        %545 = vst [vmem:[%s164 + $0x40] sm:$0xff] %v419
        %546 = vst [vmem:[%s164 + $0x48] sm:$0xff] %v424
        %547 = vst [vmem:[%s164 + $0x50] sm:$0xff] %v429
        %548 = vst [vmem:[%s164 + $0x58] sm:$0xff] %v434
        %549 = vst [vmem:[%s164 + $0x60] sm:$0xff] %v439
        %550 = vst [vmem:[%s164 + $0x68] sm:$0xff] %v444
        %551 = vst [vmem:[%s164 + $0x70] sm:$0xff] %v449
        %552 = vst [vmem:[%s164 + $0x78] sm:$0xff] %v454
        %553 = vst [vmem:[%s164 + $0x80] sm:$0xff] %v459
        %554 = vst [vmem:[%s164 + $0x88] sm:$0xff] %v464
        %555 = vst [vmem:[%s164 + $0x90] sm:$0xff] %v469
        %556 = vst [vmem:[%s164 + $0x98] sm:$0xff] %v474
        %557 = vst [vmem:[%s164 + $0xa0] sm:$0xff] %v479
        %558 = vst [vmem:[%s164 + $0xa8] sm:$0xff] %v484
        %559 = vst [vmem:[%s164 + $0xb0] sm:$0xff] %v489
        %560 = vst [vmem:[%s164 + $0xb8] sm:$0xff] %v494
        %561 = vst [vmem:[%s164 + $0xc0] sm:$0xff] %v499
        %562 = vst [vmem:[%s164 + $0xc8] sm:$0xff] %v504
        %563 = vst [vmem:[%s164 + $0xd0] sm:$0xff] %v509
        %564 = vst [vmem:[%s164 + $0xd8] sm:$0xff] %v514
        %565 = vst [vmem:[%s164 + $0xe0] sm:$0xff] %v519
        %566 = vst [vmem:[%s164 + $0xe8] sm:$0xff] %v524
        %567 = vst [vmem:[%s164 + $0xf0] sm:$0xff] %v529
        %568 = vst [vmem:[%s164 + $0xf8] sm:$0xff] %v534
        %s569 = sand.u32 %s93, 1
        %s570 = scalar_lea.sflag [#allocation3], %s569
        %s571 = sand.u32 %s93, 1
        %s572 = smul.addr %s571, 256
        %s573 = scalar_lea.vmem [#allocation2], %s572
        // Predicated region
        $region33: #{tpu_custom_call.1} parent=31 // pred_check
          %p574 = pneg %p103
        $region34: #{tpu_custom_call.1} parent=31 // pred_check_branch
          %576 = sbr.rel (%p574) target = $region36
        $region35: #{tpu_custom_call.1} parent=31 // pred_region
          %s577 = smul.u32 32, %s17
          %s579 = ssub.s32 4096, 4096
          %580 = vsyncadd %s570, %s579
          %s581 = smul.addr %s577, 128
          %s582 = scalar_lea.hbm %s3, %s581
          %s583 = sshll.u32 %s573, 4
          %s584 = int_to_ptr.vmem [resolvable:$true] %s583
          %589 = dma.vmem_to_hbm [thread:$0]  %s584, 4096, %s582, %s570, 128, 128, 8
        $region36: #{tpu_custom_call.1} parent=31 // pred_fallthru
          _
      $region32: #{tpu_custom_call.1} parent=5 // pred_fallthru
        _
      %p590 = scmp.le.s32.totalorder 2, %s12
      // Predicated region
      $region37: #{tpu_custom_call.1} parent=5 // pred_check
        %p591 = pneg %p590
      $region38: #{tpu_custom_call.1} parent=5 // pred_check_branch
        %593 = sbr.rel (%p591) target = $region40
      $region39: #{tpu_custom_call.1} parent=5 // pred_region
        %s594 = ssub.s32 %s12, 2
        // Predicated region
        $region41: #{tpu_custom_call.1} parent=39 // pred_check
          %p595 = pneg %p109
        $region42: #{tpu_custom_call.1} parent=39 // pred_check_branch
          %597 = sbr.rel (%p595) target = $region44
        $region43: #{tpu_custom_call.1} parent=39 // pred_region
          %s598 = sand.u32 %s94, 1
          %s599 = scalar_lea.sflag [#allocation3], %s598
          %s600 = sand.u32 %s94, 1
          %s601 = smul.addr %s600, 256
          %s602 = scalar_lea.vmem [#allocation2], %s601
          %603 = dma.done %s599, 4096
        $region44: #{tpu_custom_call.1} parent=39 // pred_fallthru
          _
      $region40: #{tpu_custom_call.1} parent=5 // pred_fallthru
        _
    $region6: #{tpu_custom_call.1} parent=1 // loop_footer
      %s16 = sadd.s32 1, %s12
    $region7: #{tpu_custom_call.1} parent=1 // loop_footer_branch
      %11 = sbr.rel target = $region3
    $region8: #{tpu_custom_call.1} parent=1 // loop_exit
      _
    %604 = vsyncpa [#allocation3], 1
    %s605 = scalar_lea.sflag [#allocation3], 1
    %606 = vsyncpa %s605, 1

</llo_original>
